<compile_context>
chip_gen: v7x
topology: tpu7x:2x2x1
jax: 0.10.0
libtpu: 0.0.40
codegen_flags: <defaults>
</compile_context>

<pallas_src>
import functools
import math

import jax
import jax.numpy as jnp
from jax import lax
from jax.experimental import pallas as pl
from jax.experimental.pallas import tpu as pltpu

_LANE = 128      # lane (last-dim) tile width
_SUBLANE = 8     # sublane tile for f32


def _round_up(x, m):
    return ((x + m - 1) // m) * m


def _vmem_limit_bytes():
    """Generation-aware scoped-VMEM limit: ~3/4 of physical capacity
    (v5e/v6e: 128 MiB -> 96 MiB, v7x: 64 MiB -> 48 MiB)."""
    cap = 128 * 1024 * 1024
    try:
        cap = int(pltpu.get_tpu_info().vmem_capacity_bytes)
    except Exception:
        pass
    return (cap * 3) // 4


def _batch_tiling(batch, *, max_tm=512, align=_SUBLANE, min_tiles=2):
    """Pick (tm, padded_batch) with tm % align == 0, minimal padding waste,
    and >= min_tiles grid steps when batch allows (v7x megacore sharding)."""
    n = max(1, -(-_round_up(batch, align) // max_tm))
    if batch >= min_tiles * align:
        n = max(n, min_tiles)
    tm = _round_up(-(-batch // n), align)
    return tm, tm * n


def _pad_operands(x, w_t, b):
    """Zero-pad the feature dim to a lane multiple (128) for lane-dense
    stores, and cast the weight once to bf16 for the MXU."""
    _, dim = x.shape
    dim_p = _round_up(dim, _LANE)
    if dim_p != dim:
        pad = dim_p - dim
        x = jnp.pad(x, ((0, 0), (0, pad)))
        w_t = jnp.pad(w_t, ((0, pad), (0, pad)))
        b = jnp.pad(b, ((0, pad),))
    return x, w_t.astype(jnp.bfloat16), b.reshape(1, dim_p).astype(jnp.float32), dim_p


# ----------------------------------------------------------------------------
# Single evaluation: y = tanh(x @ W_t + b)   (== ODEFunc.forward(t, x))
# ----------------------------------------------------------------------------
def _odefunc_kernel(x_ref, wt_ref, b_ref, o_ref):
    y = jnp.dot(x_ref[...].astype(jnp.bfloat16), wt_ref[...],
                preferred_element_type=jnp.float32)
    o_ref[...] = jnp.tanh(y + b_ref[...]).astype(o_ref.dtype)


def ode_func(t, x, w_t, b, *, max_tm=512):
    """Pallas implementation of ODEFunc.forward(t, x) = tanh(x @ W^T + b).

    Args:
      t:   unused scalar time (interface parity with the module).
      x:   [batch, dim] float32.
      w_t: [dim, dim] float32, transposed Linear weight (W.T).
      b:   [dim] float32 bias.
    """
    del t  # unused, exactly as in the PyTorch module
    batch, dim = x.shape
    xp, w_bf, b2, dim_p = _pad_operands(x, w_t, b)
    tm, padded_b = _batch_tiling(batch, max_tm=max_tm)
    if padded_b != batch:
        xp = jnp.pad(xp, ((0, padded_b - batch), (0, 0)))

    out = pl.pallas_call(
        _odefunc_kernel,
        out_shape=jax.ShapeDtypeStruct((padded_b, dim_p), x.dtype),
        grid_spec=pl.GridSpec(
            grid=(padded_b // tm,),
            in_specs=[
                pl.BlockSpec((tm, dim_p), lambda i: (i, 0)),       # x: batch-tiled
                pl.BlockSpec((dim_p, dim_p), lambda i: (0, 0),     # W_t: constant,
                             pipeline_mode=pl.Buffered(1)),        #   single-buffered
                pl.BlockSpec((1, dim_p), lambda i: (0, 0),         # b: constant,
                             pipeline_mode=pl.Buffered(1)),        #   single-buffered
            ],
            out_specs=pl.BlockSpec((tm, dim_p), lambda i: (i, 0)),
        ),
        compiler_params=pltpu.CompilerParams(
            dimension_semantics=("parallel",),                     # megacore on v7x
            vmem_limit_bytes=_vmem_limit_bytes(),
        ),
        cost_estimate=pl.CostEstimate(
            flops=2 * padded_b * dim_p * dim_p,
            transcendentals=padded_b * dim_p,
            bytes_accessed=4 * 2 * padded_b * dim_p + 2 * dim_p * dim_p + 4 * dim_p,
        ),
    )(xp, w_bf, b2)

    return out[:batch, :dim]


# ----------------------------------------------------------------------------
# Fused fixed-step Euler integrator: x_{k+1} = x_k + dt * tanh(x_k @ W_t + b)
# All num_steps evaluations of f run inside ONE pallas_call with W_t and b
# resident in VMEM; bias broadcast hoisted, loop unrolled, state kept in f32.
# ----------------------------------------------------------------------------
def _odefunc_euler_kernel(x_ref, wt_ref, b_ref, o_ref, *, num_steps, dt):
    w = wt_ref[...]                                    # bf16 weight, resident
    bias = jnp.broadcast_to(b_ref[...], x_ref.shape)   # ONE broadcast, hoisted
    y0 = x_ref[...].astype(jnp.float32)

    def step(_, y):
        f = jnp.tanh(
            jnp.dot(y.astype(jnp.bfloat16), w, preferred_element_type=jnp.float32)
            + bias)
        return y + dt * f

    y = lax.fori_loop(0, num_steps, step, y0, unroll=True)
    o_ref[...] = y.astype(o_ref.dtype)


def ode_integrate_euler(x0, w_t, b, *, num_steps, dt, max_tm=512):
    """num_steps explicit-Euler steps of dx/dt = tanh(x @ W^T + b), one kernel."""
    batch, dim = x0.shape
    xp, w_bf, b2, dim_p = _pad_operands(x0, w_t, b)
    tm, padded_b = _batch_tiling(batch, max_tm=max_tm)
    if padded_b != batch:
        xp = jnp.pad(xp, ((0, padded_b - batch), (0, 0)))

    kernel = functools.partial(
        _odefunc_euler_kernel, num_steps=int(num_steps), dt=float(dt))

    out = pl.pallas_call(
        kernel,
        out_shape=jax.ShapeDtypeStruct((padded_b, dim_p), x0.dtype),
        grid_spec=pl.GridSpec(
            grid=(padded_b // tm,),
            in_specs=[
                pl.BlockSpec((tm, dim_p), lambda i: (i, 0)),
                pl.BlockSpec((dim_p, dim_p), lambda i: (0, 0),
                             pipeline_mode=pl.Buffered(1)),
                pl.BlockSpec((1, dim_p), lambda i: (0, 0),
                             pipeline_mode=pl.Buffered(1)),
            ],
            out_specs=pl.BlockSpec((tm, dim_p), lambda i: (i, 0)),
        ),
        compiler_params=pltpu.CompilerParams(
            dimension_semantics=("parallel",),
            vmem_limit_bytes=_vmem_limit_bytes(),
        ),
        input_output_aliases={0: 0},                   # reuse x buffer for output
        cost_estimate=pl.CostEstimate(
            flops=2 * num_steps * padded_b * dim_p * dim_p,
            transcendentals=num_steps * padded_b * dim_p,
            bytes_accessed=4 * 2 * padded_b * dim_p + 2 * dim_p * dim_p + 4 * dim_p,
        ),
    )(xp, w_bf, b2)

    return out[:batch, :dim]


if __name__ == "__main__":
    # Small shapes implied by the module: x is [batch, dim].
    batch, dim = 8, 32

    key = jax.random.PRNGKey(0)
    kx, kw, kb = jax.random.split(key, 3)

    # nn.Linear default init: U(-1/sqrt(dim), 1/sqrt(dim)) for weight and bias.
    bound = 1.0 / math.sqrt(dim)
    w = jax.random.uniform(kw, (dim, dim), jnp.float32, -bound, bound)  # [out, in]
    b = jax.random.uniform(kb, (dim,), jnp.float32, -bound, bound)
    x = jax.random.normal(kx, (batch, dim), jnp.float32)
    t = jnp.float32(0.0)

    w_t = w.T  # kernel computes x @ W^T

    # 1) Single forward evaluation == module semantics (bf16 matmul -> loose tol).
    out = jax.block_until_ready(ode_func(t, x, w_t, b))
    ref = jnp.tanh(x @ w.T + b)
    assert out.shape == (batch, dim)
    assert jnp.allclose(out, ref, atol=2e-2, rtol=2e-2), (
        float(jnp.max(jnp.abs(out - ref))))

    # 2) Fused Euler integrator: N evaluations of f in ONE pallas_call.
    num_steps, dt = 16, 0.1
    out2 = jax.block_until_ready(
        ode_integrate_euler(x, w_t, b, num_steps=num_steps, dt=dt))
    y_ref = x
    for _ in range(num_steps):
        y_ref = y_ref + dt * jnp.tanh(y_ref @ w.T + b)
    assert out2.shape == (batch, dim)
    assert jnp.allclose(out2, y_ref, atol=5e-2, rtol=5e-2), (
        float(jnp.max(jnp.abs(out2 - y_ref))))

    print("KERNEL_OK")
</pallas_src>

<mosaic_0001>
module attributes {stable_mosaic.version = 11 : i64} {
  func.func @_odefunc_kernel(%arg0: i32, %arg1: memref<8x128xf32, #tpu.memory_space<vmem>>, %arg2: memref<128x128xbf16, #tpu.memory_space<vmem>>, %arg3: memref<1x128xf32, #tpu.memory_space<vmem>>, %arg4: memref<8x128xf32, #tpu.memory_space<vmem>>) attributes {dimension_semantics = [#tpu.dimension_semantics<parallel>], iteration_bounds = array<i64: 1>, scalar_prefetch = 0 : i64, scratch_operands = 0 : i64, tpu.core_type = #tpu.core_type<tc>, window_params = [{transform_indices = @transform_0, window_bounds = array<i64: 8, 128>}, {pipeline_mode = #tpu.pipeline_mode<synchronous>, transform_indices = @transform_1, window_bounds = array<i64: 128, 128>}, {pipeline_mode = #tpu.pipeline_mode<synchronous>, transform_indices = @transform_2, window_bounds = array<i64: 1, 128>}, {transform_indices = @transform_3, window_bounds = array<i64: 8, 128>}]} {
    %c0 = arith.constant 0 : index
    %c0_0 = arith.constant 0 : index
    %0 = vector.load %arg1[%c0, %c0_0] : memref<8x128xf32, #tpu.memory_space<vmem>>, vector<8x128xf32>
    %1 = arith.truncf %0 : vector<8x128xf32> to vector<8x128xbf16>
    %c0_1 = arith.constant 0 : index
    %c0_2 = arith.constant 0 : index
    %2 = vector.load %arg2[%c0_1, %c0_2] : memref<128x128xbf16, #tpu.memory_space<vmem>>, vector<128x128xbf16>
    %cst = arith.constant dense<0.000000e+00> : vector<8x128xf32>
    %3 = tpu.matmul %1, %2, %cst {dimension_numbers = #tpu.dot_dimension_numbers<[1], [0], [0], [1], [0, 0, 1, 1], [], []>} : vector<8x128xbf16>, vector<128x128xbf16>, vector<8x128xf32> -> vector<8x128xf32>
    %c0_3 = arith.constant 0 : index
    %c0_4 = arith.constant 0 : index
    %4 = vector.load %arg3[%c0_3, %c0_4] : memref<1x128xf32, #tpu.memory_space<vmem>>, vector<1x128xf32>
    %5 = vector.broadcast %4 : vector<1x128xf32> to vector<8x128xf32>
    %6 = arith.addf %3, %5 : vector<8x128xf32>
    %7 = math.tanh %6 : vector<8x128xf32>
    %c0_5 = arith.constant 0 : index
    %c0_6 = arith.constant 0 : index
    %8 = vector.load %arg4[%c0_5, %c0_6] : memref<8x128xf32, #tpu.memory_space<vmem>>, vector<8x128xf32>
    tpu.vector_store %arg4[%c0_5, %c0_6], %7 {strides = array<i32>} : memref<8x128xf32, #tpu.memory_space<vmem>>, vector<8x128xf32>,
    return
  }
  func.func @transform_0(%arg0: i32) -> (i32, i32) {
    %c0_i32 = arith.constant 0 : i32
    %c0_i32_0 = arith.constant 0 : i32
    return %arg0, %c0_i32 : i32, i32
  }
  func.func @transform_1(%arg0: i32) -> (i32, i32) {
    %c0_i32 = arith.constant 0 : i32
    %c0_i32_0 = arith.constant 0 : i32
    %c0_i32_1 = arith.constant 0 : i32
    return %c0_i32, %c0_i32_0 : i32, i32
  }
  func.func @transform_2(%arg0: i32) -> (i32, i32) {
    %c0_i32 = arith.constant 0 : i32
    %c0_i32_0 = arith.constant 0 : i32
    %c0_i32_1 = arith.constant 0 : i32
    return %c0_i32, %c0_i32_0 : i32, i32
  }
  func.func @transform_3(%arg0: i32) -> (i32, i32) {
    %c0_i32 = arith.constant 0 : i32
    %c0_i32_0 = arith.constant 0 : i32
    return %arg0, %c0_i32 : i32, i32
  }
}

</mosaic_0001>

<llo_original>
// kernel: tpu_custom_call.1
$region0: #{tpu_custom_call.1}
  #allocation0 [shape = 'u32[]', space=smem, size = 0x4, offset = 0x4, fixed_abs, tag = 'smem constant byte address 0x4 - core index']
  #allocation1 [shape = 'u32[144,128]{1,0:T(1,128)}', space=vmem, size = 0x12000, scoped, tag = 'internal scratch']
  %s0 = inlined_call_operand.hbm [shape: f32[8,128], index: 0, kind: input, shape index: {}]
  %s1 = inlined_call_operand.hbm [shape: bf16[128,128], index: 1, kind: input, shape index: {}]
  %s2 = inlined_call_operand.hbm [shape: f32[1,128], index: 2, kind: input, shape index: {}]
  %s3 = inlined_call_operand.hbm [shape: f32[8,128], index: 3, kind: output, shape index: {}]
  %s4 = sld [smem:[#allocation0]]
  $region34: #{tpu_custom_call.1} parent=0
    _
  %s6 = ssub.s32 1, %s4
  %s7 = scalar_select 0, %s6, %s4
  $region1: #{tpu_custom_call.1} parent=0
    #allocation2 [shape = 'u8[4096]{0}', space=vmem, size = 0x1000, scoped, tag = 'input window, operand 0, single buffered']
    #allocation3 [shape = 's32[1]{0}', space=sflag, size = 0x4, scoped, tag = 'scoped memory for tpu_custom_call.1']
    #allocation4 [shape = 's32[1]{0}', space=sflag, size = 0x4, scoped, tag = 'scoped memory for tpu_custom_call.1']
    #allocation5 [shape = 'u8[32768]{0}', space=vmem, size = 0x8000, scoped, tag = 'input window, operand 1, single buffered']
    #allocation6 [shape = 's32[1]{0}', space=sflag, size = 0x4, scoped, tag = 'scoped memory for tpu_custom_call.1']
    #allocation7 [shape = 'u8[512]{0}', space=vmem, size = 0x400, scoped, tag = 'input window, operand 2, single buffered']
    #allocation8 [shape = 'u8[4096]{0}', space=vmem, size = 0x1000, scoped, tag = 'output window, operand 0, single buffered']
    %8 = vsyncpa [#allocation3], 0
    %9 = vsyncpa [#allocation6], 0
    %10 = vsyncpa [#allocation4], 0
    // Predicated region
    $region2: #{tpu_custom_call.1} parent=1 // pred_check
      _
    $region3: #{tpu_custom_call.1} parent=1 // pred_check_branch
      %12 = sbr.rel (0) target = $region5
    $region4: #{tpu_custom_call.1} parent=1 // pred_region
      %s14 = ssub.s32 128, 128
      %15 = vsyncadd [#allocation3], %s14
      %s17 = sshll.u32 [#allocation2], 4
      %s18 = int_to_ptr.vmem [resolvable:$true] %s17
      %20 = dma.hbm_to_vmem [thread:$0]  %s0, 128, %s18, [#allocation3]
    $region5: #{tpu_custom_call.1} parent=1 // pred_fallthru
      _
    // Predicated region
    $region6: #{tpu_custom_call.1} parent=1 // pred_check
      _
    $region7: #{tpu_custom_call.1} parent=1 // pred_check_branch
      %22 = sbr.rel (0) target = $region9
    $region8: #{tpu_custom_call.1} parent=1 // pred_region
      %s24 = ssub.s32 1024, 1024
      %25 = vsyncadd [#allocation6], %s24
      %s26 = sshll.u32 [#allocation5], 4
      %s27 = int_to_ptr.vmem [resolvable:$true] %s26
      %32 = dma.hbm_to_vmem [thread:$0]  %s1, 1024, %s27, [#allocation6], 64, 64, 4
    $region9: #{tpu_custom_call.1} parent=1 // pred_fallthru
      _
    // Predicated region
    $region10: #{tpu_custom_call.1} parent=1 // pred_check
      _
    $region11: #{tpu_custom_call.1} parent=1 // pred_check_branch
      %34 = sbr.rel (0) target = $region13
    $region12: #{tpu_custom_call.1} parent=1 // pred_region
      %s36 = ssub.s32 16, 16
      %37 = vsyncadd [#allocation6], %s36
      %s39 = sshll.u32 [#allocation7], 4
      %s40 = int_to_ptr.vmem [resolvable:$true] %s39
      %42 = dma.hbm_to_vmem [thread:$0]  %s2, 16, %s40, [#allocation6]
    $region13: #{tpu_custom_call.1} parent=1 // pred_fallthru
      _
    // Predicated region
    $region14: #{tpu_custom_call.1} parent=1 // pred_check
      _
    $region15: #{tpu_custom_call.1} parent=1 // pred_check_branch
      %44 = sbr.rel (0) target = $region17
    $region16: #{tpu_custom_call.1} parent=1 // pred_region
      %45 = dma.done [#allocation3], 128
    $region17: #{tpu_custom_call.1} parent=1 // pred_fallthru
      _
    // Predicated region
    $region18: #{tpu_custom_call.1} parent=1 // pred_check
      _
    $region19: #{tpu_custom_call.1} parent=1 // pred_check_branch
      %47 = sbr.rel (0) target = $region21
    $region20: #{tpu_custom_call.1} parent=1 // pred_region
      %48 = dma.done [#allocation6], 1024
    $region21: #{tpu_custom_call.1} parent=1 // pred_fallthru
      _
    // Predicated region
    $region22: #{tpu_custom_call.1} parent=1 // pred_check
      _
    $region23: #{tpu_custom_call.1} parent=1 // pred_check_branch
      %50 = sbr.rel (0) target = $region25
    $region24: #{tpu_custom_call.1} parent=1 // pred_region
      %51 = dma.done [#allocation6], 16
    $region25: #{tpu_custom_call.1} parent=1 // pred_fallthru
      _
    %v53 = vld [vmem:[#allocation2] sm:$0xff]
    %v54 = vpack.c.bf16 %v53, %v53
    %v55 = vld [vmem:[#allocation5] sm:$0xf]
    %v56 = vld [vmem:[#allocation5 + $0x4] sm:$0xf]
    %v57 = vld [vmem:[#allocation5 + $0x8] sm:$0xf]
    %v58 = vld [vmem:[#allocation5 + $0xc] sm:$0xf]
    %v59 = vld [vmem:[#allocation5 + $0x10] sm:$0xf]
    %v60 = vld [vmem:[#allocation5 + $0x14] sm:$0xf]
    %v61 = vld [vmem:[#allocation5 + $0x18] sm:$0xf]
    %v62 = vld [vmem:[#allocation5 + $0x1c] sm:$0xf]
    %v63 = vld [vmem:[#allocation5 + $0x20] sm:$0xf]
    %v64 = vld [vmem:[#allocation5 + $0x24] sm:$0xf]
    %v65 = vld [vmem:[#allocation5 + $0x28] sm:$0xf]
    %v66 = vld [vmem:[#allocation5 + $0x2c] sm:$0xf]
    %v67 = vld [vmem:[#allocation5 + $0x30] sm:$0xf]
    %v68 = vld [vmem:[#allocation5 + $0x34] sm:$0xf]
    %v69 = vld [vmem:[#allocation5 + $0x38] sm:$0xf]
    %v70 = vld [vmem:[#allocation5 + $0x3c] sm:$0xf]
    %v71 = vld [vmem:[#allocation7] sm:$0x1]
    %v73 = vlaneseq
    %v74 = vshrl.u32 %v73, 7
    %v75 = vsub.s32 0, %v74
    %v76 = vrot.slane %v71, %v75
    %v94 = vunpack.c.l.b16 %v55
    %v95 = vunpack.c.l.b16 %v56
    %v96 = vunpack.c.l.b16 %v57
    %v97 = vunpack.c.l.b16 %v58
    %v98 = vunpack.c.l.b16 %v59
    %v99 = vunpack.c.l.b16 %v60
    %v100 = vunpack.c.l.b16 %v61
    %v101 = vunpack.c.l.b16 %v62
    %v102 = vunpack.c.l.b16 %v63
    %v103 = vunpack.c.l.b16 %v64
    %v104 = vunpack.c.l.b16 %v65
    %v105 = vunpack.c.l.b16 %v66
    %v106 = vunpack.c.l.b16 %v67
    %v107 = vunpack.c.l.b16 %v68
    %v108 = vunpack.c.l.b16 %v69
    %v109 = vunpack.c.l.b16 %v70
    %v110 = vpack.c.b16 %v95, %v94
    %v111 = vpack.c.b16 %v97, %v96
    %v112 = vpack.c.b16 %v99, %v98
    %v113 = vpack.c.b16 %v101, %v100
    %v114 = vpack.c.b16 %v103, %v102
    %v115 = vpack.c.b16 %v105, %v104
    %v116 = vpack.c.b16 %v107, %v106
    %v117 = vpack.c.b16 %v109, %v108
    %126 = vmatprep.subr.bf16.mxu0 0
    %127 = vmatpush1.bf16.msra.mxu0 %v110
    %128 = vmatprep.subr.bf16.mxu0 0
    %129 = vmatpush1.bf16.msra.mxu0 %v111
    %130 = vmatprep.subr.bf16.mxu0 0
    %131 = vmatpush1.bf16.msra.mxu0 %v112
    %132 = vmatprep.subr.bf16.mxu0 0
    %133 = vmatpush1.bf16.msra.mxu0 %v113
    %134 = vmatprep.subr.bf16.mxu0 0
    %135 = vmatpush1.bf16.msra.mxu0 %v114
    %136 = vmatprep.subr.bf16.mxu0 0
    %137 = vmatpush1.bf16.msra.mxu0 %v115
    %138 = vmatprep.subr.bf16.mxu0 0
    %139 = vmatpush1.bf16.msra.mxu0 %v116
    %140 = vmatprep.subr.bf16.mxu0 0
    %141 = vmatpush1.bf16.msra.mxu0 %v117
    %142 = vmatprep.subr.bf16.mxu0 0
    %143 = vmatpush1.bf16.msra.mxu0 0
    %144 = vmatprep.subr.bf16.mxu0 0
    %145 = vmatpush1.bf16.msra.mxu0 0
    %146 = vmatprep.subr.bf16.mxu0 0
    %147 = vmatpush1.bf16.msra.mxu0 0
    %148 = vmatprep.subr.bf16.mxu0 0
    %149 = vmatpush1.bf16.msra.mxu0 0
    %150 = vmatprep.subr.bf16.mxu0 0
    %151 = vmatpush1.bf16.msra.mxu0 0
    %152 = vmatprep.subr.bf16.mxu0 0
    %153 = vmatpush1.bf16.msra.mxu0 0
    %154 = vmatprep.subr.bf16.mxu0 0
    %155 = vmatpush1.bf16.msra.mxu0 0
    %156 = vmatprep.subr.bf16.mxu0 0
    %157 = vmatpush1.bf16.msra.mxu0 0
    %158 = vmatprep.mubr.bf16.mxu0 0
    %159 = vmatmul.mubr.bf16.gmra.mrb[0].mxu0 %v54
    %v160 = vpop.f32.mrb[0].mxu0
    %v161 = vadd.f32 %v76, %v160
    %v162 = vpop.f32.mrb[0].mxu0
    %v163 = vpop.f32.mrb[0].mxu0
    %v164 = vpop.f32.mrb[0].mxu0
    %165 = vdwg.mxu0
    %v166 = vtanh.pop %v161
    %167 = vst [vmem:[#allocation8] sm:$0xff] %v166
    // Predicated region
    $region26: #{tpu_custom_call.1} parent=1 // pred_check
      _
    $region27: #{tpu_custom_call.1} parent=1 // pred_check_branch
      %169 = sbr.rel (0) target = $region29
    $region28: #{tpu_custom_call.1} parent=1 // pred_region
      %s171 = ssub.s32 128, 128
      %172 = vsyncadd [#allocation4], %s171
      %s174 = sshll.u32 [#allocation8], 4
      %s175 = int_to_ptr.vmem [resolvable:$true] %s174
      %177 = dma.vmem_to_hbm [thread:$0]  %s175, 128, %s3, [#allocation4]
    $region29: #{tpu_custom_call.1} parent=1 // pred_fallthru
      _
    // Predicated region
    $region30: #{tpu_custom_call.1} parent=1 // pred_check
      _
    $region31: #{tpu_custom_call.1} parent=1 // pred_check_branch
      %179 = sbr.rel (0) target = $region33
    $region32: #{tpu_custom_call.1} parent=1 // pred_region
      %180 = dma.done [#allocation4], 128
    $region33: #{tpu_custom_call.1} parent=1 // pred_fallthru
      _
    %181 = vsyncpa [#allocation3], 1
    %182 = vsyncpa [#allocation6], 1
    %183 = vsyncpa [#allocation4], 1

</llo_original>
